<compile_context>
chip_gen: v6e
topology: v6e:2x2x1
jax: 0.10.0
libtpu: 0.0.40
codegen_flags: <defaults>
</compile_context>

<pallas_src>
import functools

import jax
import jax.numpy as jnp
from jax import lax
from jax.experimental import pallas as pl
from jax.experimental.pallas import tpu as pltpu

LANES = 128
_SMALL_INPUT_BYTES = 1 << 20      # below ~1 MiB total, plain JAX is faster
_BLOCK_BYTES_TARGET = 8 * 1024 * 1024   # per input per pipeline buffer


def _cdiv(a, b):
    return (a + b - 1) // b


def _pow_fast(x, gamma):
    """x ** gamma with an integer-gamma fast path (VPU multiplies, no EUP pow)."""
    g = float(gamma)
    if g.is_integer() and 1 <= int(g) <= 16:
        v = x
        for _ in range(int(g) - 1):
            v = v * x
        return v
    return x ** jnp.float32(g)


def _l0_elems(p, t, gamma, eps):
    x = jnp.abs(p.astype(jnp.float32) - t.astype(jnp.float32)) + jnp.float32(eps)
    return _pow_fast(x, gamma)


def _l0_loss_ref(pred, target, gamma, eps):
    """Plain-JAX fallback for tiny inputs."""
    return jnp.mean(_l0_elems(pred, target, gamma, eps))


def _tpu_config(itemsize):
    """Per-generation tiling: (num_slices, block_rows_max, vmem_limit_bytes)."""
    kind = ""
    try:
        kind = jax.devices()[0].device_kind.lower()
    except Exception:
        pass
    multi_tc = ("v7" in kind) or ("7x" in kind)     # v7x: 2 TensorCores / chip
    block_rows_max = max(8, _BLOCK_BYTES_TARGET // (LANES * itemsize))
    if multi_tc:
        # v7x has only 64 MiB VMEM per TC: keep the scoped limit conservative.
        # 2 inputs x 2 pipeline buffers x 8 MiB = 32 MiB << 48 MiB.
        return 2, block_rows_max, 48 * 1024 * 1024
    # v5e / v6e: single TensorCore, 128 MiB physical VMEM
    # (explicit limit still required on v5e whose scoped default is 16 MiB).
    return 1, block_rows_max, 64 * 1024 * 1024


def _l0_loss_kernel(p_ref, t_ref, o_ref, *, gamma, eps, block_rows, acc_rows,
                    chunks_per_slice, full_chunks, rows, has_tail, gate_fast):
    c = pl.program_id(0)            # slice (parallel; one per TensorCore on v7x)
    j = pl.program_id(1)            # chunk within slice (reduction axis)
    g = c * chunks_per_slice + j    # global chunk index

    @pl.when(j == 0)
    def _init():
        o_ref[...] = jnp.zeros_like(o_ref)

    def _accumulate(mask_rows):
        p = p_ref[...].astype(jnp.float32)
        t = t_ref[...].astype(jnp.float32)
        v = _pow_fast(jnp.abs(p - t) + jnp.float32(eps), gamma)
        if mask_rows:
            # only the single boundary chunk pays for iota/compare/select;
            # row counts stay tiny (<= n/128), so no int32 overflow risk.
            valid = rows - g * block_rows
            row = lax.broadcasted_iota(jnp.int32, (block_rows, LANES), 0)
            # keep this a select (not mul-by-mask) so OOB garbage can't leak
            v = jnp.where(row < valid, v, jnp.float32(0.0))
        # break the serial add chain: acc_rows (up to 32 -> 4 vregs) of
        # independent per-lane accumulators, reduced once in the wrapper.
        partial = jnp.sum(v.reshape(block_rows // acc_rows, acc_rows, LANES), axis=0)
        o_ref[...] += partial[None, :, :]

    if gate_fast:
        @pl.when(g < full_chunks)
        def _fast():
            _accumulate(False)
    else:
        _accumulate(False)          # every chunk is full: no branch at all

    if has_tail:
        @pl.when(g == full_chunks)
        def _tail():
            _accumulate(True)
    # chunks with g > last valid chunk (clamped duplicates from the ceil split)
    # fall through both `when`s: no compute, no accumulation.


def l0_loss(pred, target, gamma=2, eps=1e-08, *, force_kernel=False):
    assert pred.shape == target.shape, "pred/target shape mismatch"
    n = int(pred.size)
    if n == 0:
        return jnp.float32(jnp.nan)

    p_flat = pred.reshape(-1)       # contiguous reshape: no copy
    t_flat = target.reshape(-1)

    itemsize = max(jnp.dtype(pred.dtype).itemsize, jnp.dtype(target.dtype).itemsize)
    pack = max(1, 4 // itemsize)    # sub-32-bit dtypes pack 2/4 rows per sublane
    row_tile = 8 * pack

    rows = n // LANES               # 128-aligned prefix only; never pad
    small = (n * itemsize < _SMALL_INPUT_BYTES) and not force_kernel
    if small or rows < row_tile:
        # launch / alignment overhead dominates: XLA fusion is strictly faster
        return _l0_loss_ref(p_flat, t_flat, gamma, eps)

    aligned = rows * LANES
    if aligned != n:
        # <128-element ragged tail handled in plain JAX (negligible traffic)
        tail_sum = jnp.sum(_l0_elems(p_flat[aligned:], t_flat[aligned:], gamma, eps))
        p_main = p_flat[:aligned]
        t_main = t_flat[:aligned]
    else:
        tail_sum = jnp.float32(0.0)
        p_main = p_flat
        t_main = t_flat

    p2 = p_main.reshape(rows, LANES)
    t2 = t_main.reshape(rows, LANES)

    num_slices, block_rows_max, vmem_limit = _tpu_config(itemsize)
    if rows < num_slices * row_tile:
        num_slices = 1

    rows_per_slice = _cdiv(rows, num_slices)
    block_rows = min(block_rows_max,
                     max(row_tile, (rows_per_slice // row_tile) * row_tile))
    total_chunks = _cdiv(rows, block_rows)
    if total_chunks < num_slices:   # defensive; should not trigger
        num_slices = 1
        total_chunks = _cdiv(rows, block_rows)

    # v7x: keep both TensorCores evenly loaded (even chunk count if possible)
    if num_slices == 2 and total_chunks % 2 == 1:
        for target_chunks in (total_chunks - 1, total_chunks + 1):
            if target_chunks < 2:
                continue
            cand = _cdiv(_cdiv(rows, target_chunks), row_tile) * row_tile
            if not (row_tile <= cand <= min(block_rows_max, rows)):
                continue
            if _cdiv(rows, cand) % 2 == 0:
                block_rows = cand
                total_chunks = _cdiv(rows, block_rows)
                break

    chunks_per_slice = _cdiv(total_chunks, num_slices)
    full_chunks = rows // block_rows
    has_tail = (rows % block_rows) != 0
    has_dup = (num_slices * chunks_per_slice) > total_chunks
    last_chunk = total_chunks - 1
    acc_rows = 32 if block_rows % 32 == 0 else (16 if block_rows % 16 == 0 else 8)

    def in_map(c, j):
        g = c * chunks_per_slice + j
        if has_dup:
            # OOB chunk re-reads the last valid chunk; its compute is skipped.
            g = jnp.minimum(g, last_chunk)
        return (g, 0)

    kernel = functools.partial(
        _l0_loss_kernel,
        gamma=gamma,
        eps=float(eps),
        block_rows=block_rows,
        acc_rows=acc_rows,
        chunks_per_slice=chunks_per_slice,
        full_chunks=full_chunks,
        rows=rows,
        has_tail=has_tail,
        gate_fast=(has_tail or has_dup),
    )

    partials = pl.pallas_call(
        kernel,
        out_shape=jax.ShapeDtypeStruct((num_slices, acc_rows, LANES), jnp.float32),
        grid_spec=pltpu.PrefetchScalarGridSpec(
            num_scalar_prefetch=0,
            grid=(num_slices, chunks_per_slice),
            in_specs=[
                pl.BlockSpec((block_rows, LANES), in_map),
                pl.BlockSpec((block_rows, LANES), in_map),
            ],
            out_specs=pl.BlockSpec((1, acc_rows, LANES), lambda c, j: (c, 0, 0)),
        ),
        compiler_params=pltpu.CompilerParams(
            # "parallel" shards the slice axis across TCs on multi-TC parts;
            # inner (reduction) axis stays "arbitrary".
            dimension_semantics=("parallel", "arbitrary"),
            vmem_limit_bytes=vmem_limit,
        ),
    )(p2, t2)

    # single cross-lane reduce + mean, done once in plain JAX
    return (jnp.sum(partials) + tail_sum) / jnp.float32(n)


if __name__ == "__main__":
    key = jax.random.PRNGKey(0)
    k1, k2, k3, k4 = jax.random.split(key, 4)

    # NCHW-style image batch (small, lane-aligned)
    shape = (2, 4, 16, 16)
    pred = jax.random.normal(k1, shape, dtype=jnp.float32)
    target = jax.random.normal(k2, shape, dtype=jnp.float32)

    ref = jnp.mean((jnp.abs(pred - target) + 1e-08) ** 2.0)

    # exercise the Pallas kernel path explicitly (small inputs would otherwise
    # take the plain-JAX fast path)
    loss = l0_loss(pred, target, gamma=2, eps=1e-08, force_kernel=True)
    jax.block_until_ready(loss)
    assert jnp.allclose(loss, ref, rtol=1e-5, atol=1e-5), (loss, ref)

    # auto path (small-input fallback) must agree as well
    loss_auto = l0_loss(pred, target, gamma=2, eps=1e-08)
    jax.block_until_ready(loss_auto)
    assert jnp.allclose(loss_auto, ref, rtol=1e-5, atol=1e-5), (loss_auto, ref)

    # misaligned size: exercises the in-kernel row-tail mask and the wrapper's
    # <128-element lane tail (no padding copies anywhere)
    shape2 = (3, 4, 13, 11)   # 1716 elements = 13 aligned rows + 52-element tail
    pred2 = jax.random.normal(k3, shape2, dtype=jnp.float32)
    target2 = jax.random.normal(k4, shape2, dtype=jnp.float32)
    loss2 = l0_loss(pred2, target2, gamma=2, eps=1e-08, force_kernel=True)
    jax.block_until_ready(loss2)
    ref2 = jnp.mean((jnp.abs(pred2 - target2) + 1e-08) ** 2.0)
    assert jnp.allclose(loss2, ref2, rtol=1e-5, atol=1e-5), (loss2, ref2)

    print("KERNEL_OK")
</pallas_src>

<mosaic_0001>
module attributes {stable_mosaic.version = 11 : i64} {
  func.func @_l0_loss_kernel(%arg0: i32, %arg1: i32, %arg2: memref<16x128xf32, #tpu.memory_space<vmem>>, %arg3: memref<16x128xf32, #tpu.memory_space<vmem>>, %arg4: memref<1x16x128xf32, #tpu.memory_space<vmem>>) attributes {dimension_semantics = [#tpu.dimension_semantics<parallel>, #tpu.dimension_semantics<arbitrary>], iteration_bounds = array<i64: 1, 1>, scalar_prefetch = 0 : i64, scratch_operands = 0 : i64, tpu.core_type = #tpu.core_type<tc>, window_params = [{transform_indices = @transform_0, window_bounds = array<i64: 16, 128>}, {transform_indices = @transform_1, window_bounds = array<i64: 16, 128>}, {transform_indices = @transform_2, window_bounds = array<i64: 1, 16, 128>}]} {
    %c0_i32 = arith.constant 0 : i32
    %0 = arith.cmpi eq, %arg1, %c0_i32 : i32
    %1 = arith.extui %0 : i1 to i32
    %c0_i32_0 = arith.constant 0 : i32
    %2 = arith.cmpi ne, %1, %c0_i32_0 : i32
    scf.if %2 {
      %cst_11 = arith.constant 0.000000e+00 : f32
      %16 = vector.broadcast %cst_11 : f32 to vector<1x16x128xf32>
      %c0_12 = arith.constant 0 : index
      %c0_13 = arith.constant 0 : index
      %c0_14 = arith.constant 0 : index
      %17 = vector.load %arg4[%c0_12, %c0_13, %c0_14] : memref<1x16x128xf32, #tpu.memory_space<vmem>>, vector<1x16x128xf32>
      tpu.vector_store %arg4[%c0_12, %c0_13, %c0_14], %16 {strides = array<i32>} : memref<1x16x128xf32, #tpu.memory_space<vmem>>, vector<1x16x128xf32>,
    } else {
    }
    %c0 = arith.constant 0 : index
    %c0_1 = arith.constant 0 : index
    %3 = vector.load %arg2[%c0, %c0_1] : memref<16x128xf32, #tpu.memory_space<vmem>>, vector<16x128xf32>
    %c0_2 = arith.constant 0 : index
    %c0_3 = arith.constant 0 : index
    %4 = vector.load %arg3[%c0_2, %c0_3] : memref<16x128xf32, #tpu.memory_space<vmem>>, vector<16x128xf32>
    %5 = arith.subf %3, %4 : vector<16x128xf32>
    %6 = math.absf %5 : vector<16x128xf32>
    %cst = arith.constant 9.99999993E-9 : f32
    %7 = vector.broadcast %cst : f32 to vector<16x128xf32>
    %8 = arith.addf %6, %7 : vector<16x128xf32>
    %9 = arith.mulf %8, %8 : vector<16x128xf32>
    %10 = vector.shape_cast %9 : vector<16x128xf32> to vector<1x16x128xf32>
    %cst_4 = arith.constant dense<0.000000e+00> : vector<16x128xf32>
    %11 = vector.multi_reduction <add>, %10, %cst_4 [0] : vector<1x16x128xf32> to vector<16x128xf32>
    %c0_5 = arith.constant 0 : index
    %c0_6 = arith.constant 0 : index
    %c0_7 = arith.constant 0 : index
    %12 = vector.load %arg4[%c0_5, %c0_6, %c0_7] : memref<1x16x128xf32, #tpu.memory_space<vmem>>, vector<1x16x128xf32>
    %13 = vector.shape_cast %11 : vector<16x128xf32> to vector<1x16x128xf32>
    %14 = arith.addf %12, %13 : vector<1x16x128xf32>
    %c0_8 = arith.constant 0 : index
    %c0_9 = arith.constant 0 : index
    %c0_10 = arith.constant 0 : index
    %15 = vector.load %arg4[%c0_8, %c0_9, %c0_10] : memref<1x16x128xf32, #tpu.memory_space<vmem>>, vector<1x16x128xf32>
    tpu.vector_store %arg4[%c0_8, %c0_9, %c0_10], %14 {strides = array<i32>} : memref<1x16x128xf32, #tpu.memory_space<vmem>>, vector<1x16x128xf32>,
    return
  }
  func.func @transform_0(%arg0: i32, %arg1: i32) -> (i32, i32) {
    %c1_i32 = arith.constant 1 : i32
    %0 = arith.muli %arg0, %c1_i32 : i32
    %1 = arith.addi %0, %arg1 : i32
    %c0_i32 = arith.constant 0 : i32
    %c0_i32_0 = arith.constant 0 : i32
    return %1, %c0_i32 : i32, i32
  }
  func.func @transform_1(%arg0: i32, %arg1: i32) -> (i32, i32) {
    %c1_i32 = arith.constant 1 : i32
    %0 = arith.muli %arg0, %c1_i32 : i32
    %1 = arith.addi %0, %arg1 : i32
    %c0_i32 = arith.constant 0 : i32
    %c0_i32_0 = arith.constant 0 : i32
    return %1, %c0_i32 : i32, i32
  }
  func.func @transform_2(%arg0: i32, %arg1: i32) -> (i32, i32, i32) {
    %c0_i32 = arith.constant 0 : i32
    %c0_i32_0 = arith.constant 0 : i32
    %c0_i32_1 = arith.constant 0 : i32
    return %arg0, %c0_i32, %c0_i32_0 : i32, i32, i32
  }
}

</mosaic_0001>

<llo_original>
// kernel: tpu_custom_call.1
$region0: #{tpu_custom_call.1}
  #allocation0 [shape = 'u32[]', space=smem, size = 0x4, offset = 0x4, fixed_abs, tag = 'smem constant byte address 0x4 - core index']
  #allocation1 [shape = 'u32[144,128]{1,0:T(1,128)}', space=vmem, size = 0x12000, scoped, tag = 'internal scratch']
  %s0 = inlined_call_operand.hbm [shape: f32[16,128], index: 0, kind: input, shape index: {}]
  %s1 = inlined_call_operand.hbm [shape: f32[16,128], index: 1, kind: input, shape index: {}]
  %s2 = inlined_call_operand.hbm [shape: f32[1,16,128], index: 2, kind: output, shape index: {}]
  %s3 = sld [smem:[#allocation0]]
  $region30: #{tpu_custom_call.1} parent=0
    _
  %s5 = ssub.s32 1, %s3
  %s6 = scalar_select 0, %s5, %s3
  $region1: #{tpu_custom_call.1} parent=0
    #allocation2 [shape = 'u8[8192]{0}', space=vmem, size = 0x2000, scoped, tag = 'input window, operand 0, single buffered']
    #allocation3 [shape = 's32[1]{0}', space=sflag, size = 0x4, scoped, tag = 'scoped memory for tpu_custom_call.1']
    #allocation4 [shape = 's32[1]{0}', space=sflag, size = 0x4, scoped, tag = 'scoped memory for tpu_custom_call.1']
    #allocation5 [shape = 'u8[8192]{0}', space=vmem, size = 0x2000, scoped, tag = 'input window, operand 1, single buffered']
    #allocation6 [shape = 's32[1]{0}', space=sflag, size = 0x4, scoped, tag = 'scoped memory for tpu_custom_call.1']
    #allocation7 [shape = 'u8[8192]{0}', space=vmem, size = 0x2000, scoped, tag = 'output window, operand 0, single buffered']
    %7 = vsyncpa [#allocation3], 0
    %8 = vsyncpa [#allocation6], 0
    %9 = vsyncpa [#allocation4], 0
    // Predicated region
    $region2: #{tpu_custom_call.1} parent=1 // pred_check
      _
    $region3: #{tpu_custom_call.1} parent=1 // pred_check_branch
      %11 = sbr.rel (0) target = $region5
    $region4: #{tpu_custom_call.1} parent=1 // pred_region
      %s12 = sadd.s32 0, 0
      %s13 = smul.u32 2, %s12
      %s15 = ssub.s32 256, 256
      %16 = vsyncadd [#allocation3], %s15
      %s17 = smul.addr %s13, 128
      %s18 = scalar_lea.hbm %s0, %s17
      %s19 = sshll.u32 [#allocation2], 4
      %s20 = int_to_ptr.vmem [resolvable:$true] %s19
      %25 = dma.hbm_to_vmem [thread:$0]  %s18, 256, %s20, [#allocation3], 128, 128, 8
    $region5: #{tpu_custom_call.1} parent=1 // pred_fallthru
      _
    // Predicated region
    $region6: #{tpu_custom_call.1} parent=1 // pred_check
      _
    $region7: #{tpu_custom_call.1} parent=1 // pred_check_branch
      %27 = sbr.rel (0) target = $region9
    $region8: #{tpu_custom_call.1} parent=1 // pred_region
      %s28 = sadd.s32 0, 0
      %s29 = smul.u32 2, %s28
      %s31 = ssub.s32 256, 256
      %32 = vsyncadd [#allocation6], %s31
      %s33 = smul.addr %s29, 128
      %s34 = scalar_lea.hbm %s1, %s33
      %s35 = sshll.u32 [#allocation5], 4
      %s36 = int_to_ptr.vmem [resolvable:$true] %s35
      %41 = dma.hbm_to_vmem [thread:$0]  %s34, 256, %s36, [#allocation6], 128, 128, 8
    $region9: #{tpu_custom_call.1} parent=1 // pred_fallthru
      _
    // Predicated region
    $region10: #{tpu_custom_call.1} parent=1 // pred_check
      _
    $region11: #{tpu_custom_call.1} parent=1 // pred_check_branch
      %43 = sbr.rel (0) target = $region13
    $region12: #{tpu_custom_call.1} parent=1 // pred_region
      %44 = dma.done [#allocation3], 256
    $region13: #{tpu_custom_call.1} parent=1 // pred_fallthru
      _
    // Predicated region
    $region14: #{tpu_custom_call.1} parent=1 // pred_check
      _
    $region15: #{tpu_custom_call.1} parent=1 // pred_check_branch
      %46 = sbr.rel (0) target = $region17
    $region16: #{tpu_custom_call.1} parent=1 // pred_region
      %47 = dma.done [#allocation6], 256
    $region17: #{tpu_custom_call.1} parent=1 // pred_fallthru
      _
    %s48 = sadd.s32 0, 0
    %s49 = smul.u32 2, %s48
    %s50 = sadd.s32 0, 0
    %s51 = smul.u32 2, %s50
    %p52 = scmp.eq.s32.totalorder 0, 0
    // Predicated region
    $region18: #{tpu_custom_call.1} parent=1 // pred_check
      %p53 = pneg %p52
    $region19: #{tpu_custom_call.1} parent=1 // pred_check_branch
      %55 = sbr.rel (%p53) target = $region21
    $region20: #{tpu_custom_call.1} parent=1 // pred_region
      %56 = vst [vmem:[#allocation7] sm:$0xff] 0.0
      %57 = vst [vmem:[#allocation7 + $0x8] sm:$0xff] 0.0
    $region21: #{tpu_custom_call.1} parent=1 // pred_fallthru
      _
    %v58 = vld [vmem:[#allocation2] sm:$0xff]
    %v59 = vld [vmem:[#allocation2 + $0x8] sm:$0xff]
    %v60 = vld [vmem:[#allocation5] sm:$0xff]
    %v61 = vld [vmem:[#allocation5 + $0x8] sm:$0xff]
    %v62 = vsub.f32 %v58, %v60
    %v63 = vsub.f32 %v59, %v61
    %v64 = vand.u32 2147483647, %v62
    %v65 = vand.u32 2147483647, %v63
    %v66 = vadd.f32 %v64, 1e-08
    %v67 = vadd.f32 %v65, 1e-08
    %v68 = vmul.f32 %v66, %v66
    %v69 = vmul.f32 %v67, %v67
    %v70 = vadd.f32 %v68, 0.0
    %v71 = vadd.f32 %v69, 0.0
    %v72 = vld [vmem:[#allocation7] sm:$0xff]
    %v73 = vld [vmem:[#allocation7 + $0x8] sm:$0xff]
    %v74 = vadd.f32 %v72, %v70
    %v75 = vadd.f32 %v73, %v71
    %76 = vst [vmem:[#allocation7] sm:$0xff] %v74
    %77 = vst [vmem:[#allocation7 + $0x8] sm:$0xff] %v75
    // Predicated region
    $region22: #{tpu_custom_call.1} parent=1 // pred_check
      _
    $region23: #{tpu_custom_call.1} parent=1 // pred_check_branch
      %79 = sbr.rel (0) target = $region25
    $region24: #{tpu_custom_call.1} parent=1 // pred_region
      %s81 = ssub.s32 256, 256
      %82 = vsyncadd [#allocation4], %s81
      %s83 = sshll.u32 [#allocation7], 4
      %s84 = int_to_ptr.vmem [resolvable:$true] %s83
      %89 = dma.vmem_to_hbm [thread:$0]  %s84, 256, %s2, [#allocation4], 128, 128, 8
    $region25: #{tpu_custom_call.1} parent=1 // pred_fallthru
      _
    // Predicated region
    $region26: #{tpu_custom_call.1} parent=1 // pred_check
      _
    $region27: #{tpu_custom_call.1} parent=1 // pred_check_branch
      %91 = sbr.rel (0) target = $region29
    $region28: #{tpu_custom_call.1} parent=1 // pred_region
      %92 = dma.done [#allocation4], 256
    $region29: #{tpu_custom_call.1} parent=1 // pred_fallthru
      _
    %93 = vsyncpa [#allocation3], 1
    %94 = vsyncpa [#allocation6], 1
    %95 = vsyncpa [#allocation4], 1

</llo_original>
